<compile_context>
chip_gen: v7x
topology: tpu7x:2x2x1
jax: 0.10.0
libtpu: 0.0.40
codegen_flags: <defaults>
</compile_context>

<pallas_src>
import jax
import jax.numpy as jnp
from jax.experimental import pallas as pl
from jax.experimental.pallas import tpu as pltpu


def _l1_kernel(x_ref, y_ref, m_ref, acc_ref):
    # x_ref, y_ref: (1, C, TR, 128) native-dtype tiles of one batch element
    # m_ref:        (1, TR, 128)    mask tile (0 = bg, 1 = fg, anything else ignored)
    # acc_ref:      (1, 4, 8, 128)  f32 per-batch partial sums, resident across
    #               the HW-tile axis: [fg_sum, bg_sum, fg_pixels, bg_pixels]
    k = pl.program_id(1)

    @pl.when(k == 0)
    def _init():
        acc_ref[...] = jnp.zeros_like(acc_ref)

    x = x_ref[0].astype(jnp.float32)              # (C, TR, 128)
    y = y_ref[0].astype(jnp.float32)
    d = jnp.sum(jnp.abs(x - y), axis=0)           # (TR, 128): sum |x-y| over channels
    m = m_ref[0].astype(jnp.float32)              # (TR, 128)
    fg = (m == 1.0).astype(jnp.float32)
    bg = (m == 0.0).astype(jnp.float32)

    tr = d.shape[0]

    def part(v):                                   # (TR,128) -> (8,128): pure VPU adds
        return jnp.sum(v.reshape(tr // 8, 8, 128), axis=0)

    upd = jnp.stack([part(d * fg), part(d * bg), part(fg), part(bg)])[None]
    acc_ref[...] += upd                            # (1, 4, 8, 128)


_GRAIN = 4096  # pixel granularity: 32 sublanes x 128 lanes (f32 / bf16 / i8 safe)


def _ceil_to(a, g):
    return -(-a // g) * g


def l1_loss(logits, labels, masks, *,
            vmem_budget_bytes=12 * 1024 * 1024, max_tile_px=131072):
    """logits, labels: (B, C, H, W); masks: (B, H, W) with 0=bg, 1=fg."""
    B, C, H, W = logits.shape
    HW = H * W

    x = logits.reshape(B, C, HW)
    y = labels.reshape(B, C, HW)
    m = masks.reshape(B, HW)
    if m.dtype == jnp.bool_:
        m = m.astype(jnp.int8)        # need a pad value (2) outside {0, 1}

    # Tile size from a double-buffered VMEM byte budget (x + y + mask blocks).
    bpp = 2 * C * x.dtype.itemsize + m.dtype.itemsize
    cap = max(_GRAIN, (max_tile_px // _GRAIN) * _GRAIN)
    t = (vmem_budget_bytes // (2 * bpp)) // _GRAIN * _GRAIN
    t = max(_GRAIN, min(t, cap))
    n_tiles = max(1, -(-HW // t))
    t = _ceil_to(-(-HW // n_tiles), _GRAIN)        # re-balance so all tiles are equal
    hw_pad = n_tiles * t

    if hw_pad != HW:
        pad = hw_pad - HW
        x = jnp.pad(x, ((0, 0), (0, 0), (0, pad)))
        y = jnp.pad(y, ((0, 0), (0, 0), (0, pad)))
        m = jnp.pad(m, ((0, 0), (0, pad)), constant_values=2)  # neither fg nor bg

    R, tr = hw_pad // 128, t // 128
    x = x.reshape(B, C, R, 128)
    y = y.reshape(B, C, R, 128)
    m = m.reshape(B, R, 128)

    partials = pl.pallas_call(
        _l1_kernel,
        out_shape=jax.ShapeDtypeStruct((B, 4, 8, 128), jnp.float32),
        grid_spec=pltpu.PrefetchScalarGridSpec(
            num_scalar_prefetch=0,
            grid=(B, n_tiles),
            in_specs=[
                pl.BlockSpec((1, C, tr, 128), lambda b, k: (b, 0, k, 0)),
                pl.BlockSpec((1, C, tr, 128), lambda b, k: (b, 0, k, 0)),
                pl.BlockSpec((1, tr, 128), lambda b, k: (b, k, 0)),
            ],
            out_specs=pl.BlockSpec((1, 4, 8, 128), lambda b, k: (b, 0, 0, 0)),
        ),
        compiler_params=pltpu.CompilerParams(
            dimension_semantics=("parallel", "arbitrary"),
            vmem_limit_bytes=32 * 1024 * 1024),
    )(x, y, m)

    # Tiny epilogue: collapse the (8,128) partials and form the per-batch loss.
    sums = jnp.sum(partials, axis=(2, 3))                         # (B, 4)
    fg_sum, bg_sum = sums[:, 0], sums[:, 1]
    fg_cnt, bg_cnt = sums[:, 2] * C, sums[:, 3] * C
    # A sum is exactly 0 when its count is 0, so 0 / max(cnt, 1) == 0 matches
    # the torch.zeros() branch without a select.  (Do NOT add eps to |x-y|.)
    fg_loss = fg_sum / jnp.maximum(fg_cnt, 1.0)
    bg_loss = bg_sum / jnp.maximum(bg_cnt, 1.0)
    return jnp.mean(0.5 * (fg_loss + bg_loss))


def l1_loss_ref(logits, labels, masks):
    """Pure-JAX reference mirroring the PyTorch module."""
    B, C, H, W = logits.shape
    x = logits.reshape(B, C, H * W).astype(jnp.float32)
    y = labels.reshape(B, C, H * W).astype(jnp.float32)
    m = masks.reshape(B, H * W)
    absdiff = jnp.abs(x - y)                                   # (B, C, HW)
    fg = (m == 1).astype(jnp.float32)                          # (B, HW)
    bg = (m == 0).astype(jnp.float32)
    fg_sum = jnp.sum(absdiff * fg[:, None, :], axis=(1, 2))
    bg_sum = jnp.sum(absdiff * bg[:, None, :], axis=(1, 2))
    fg_cnt = C * jnp.sum(fg, axis=1)
    bg_cnt = C * jnp.sum(bg, axis=1)
    fg_loss = jnp.where(fg_cnt > 0, fg_sum / jnp.maximum(fg_cnt, 1.0), 0.0)
    bg_loss = jnp.where(bg_cnt > 0, bg_sum / jnp.maximum(bg_cnt, 1.0), 0.0)
    return jnp.mean(0.5 * (fg_loss + bg_loss))


if __name__ == "__main__":
    key = jax.random.PRNGKey(0)

    # --- test 1: small spatial (exercises HW padding + empty-bg branch) ------
    B, C, H, W = 2, 4, 16, 16
    k1, k2, k3 = jax.random.split(key, 3)
    logits = jax.random.normal(k1, (B, C, H, W), dtype=jnp.float32)
    labels = jax.random.normal(k2, (B, C, H, W), dtype=jnp.float32)
    m0 = jax.random.bernoulli(k3, p=0.5, shape=(1, H, W)).astype(jnp.int8)
    m1 = jnp.ones((1, H, W), dtype=jnp.int8)          # all-fg -> empty bg set
    masks = jnp.concatenate([m0, m1], axis=0)

    out = l1_loss(logits, labels, masks)
    jax.block_until_ready(out)
    ref = l1_loss_ref(logits, labels, masks)
    assert jnp.allclose(out, ref, atol=1e-5, rtol=1e-5), (out, ref)

    # --- test 2: larger spatial + small tile cap (multi-tile accumulation) ---
    B2, C2, H2, W2 = 2, 4, 128, 128
    k4, k5, k6 = jax.random.split(jax.random.fold_in(key, 1), 3)
    logits2 = jax.random.normal(k4, (B2, C2, H2, W2), dtype=jnp.float32)
    labels2 = jax.random.normal(k5, (B2, C2, H2, W2), dtype=jnp.float32)
    masks2 = jax.random.bernoulli(k6, p=0.3, shape=(B2, H2, W2)).astype(jnp.int8)
    out2 = l1_loss(logits2, labels2, masks2, max_tile_px=4096)   # 4 tiles / batch
    jax.block_until_ready(out2)
    ref2 = l1_loss_ref(logits2, labels2, masks2)
    assert jnp.allclose(out2, ref2, atol=1e-5, rtol=1e-5), (out2, ref2)

    # --- test 3: bf16 inputs streamed natively, cast to f32 inside kernel ----
    out3 = l1_loss(logits.astype(jnp.bfloat16), labels.astype(jnp.bfloat16), masks)
    jax.block_until_ready(out3)
    ref3 = l1_loss_ref(logits.astype(jnp.bfloat16), labels.astype(jnp.bfloat16), masks)
    assert jnp.allclose(out3, ref3, atol=1e-5, rtol=1e-4), (out3, ref3)

    print("KERNEL_OK")
</pallas_src>

<mosaic_0001>
module attributes {stable_mosaic.version = 11 : i64} {
  func.func @_l1_kernel(%arg0: i32, %arg1: i32, %arg2: memref<1x4x32x128xf32, #tpu.memory_space<vmem>>, %arg3: memref<1x4x32x128xf32, #tpu.memory_space<vmem>>, %arg4: memref<1x32x128xi8, #tpu.memory_space<vmem>>, %arg5: memref<1x4x8x128xf32, #tpu.memory_space<vmem>>) attributes {dimension_semantics = [#tpu.dimension_semantics<parallel>, #tpu.dimension_semantics<arbitrary>], iteration_bounds = array<i64: 2, 1>, scalar_prefetch = 0 : i64, scratch_operands = 0 : i64, tpu.core_type = #tpu.core_type<tc>, window_params = [{transform_indices = @transform_0, window_bounds = array<i64: 1, 4, 32, 128>}, {transform_indices = @transform_1, window_bounds = array<i64: 1, 4, 32, 128>}, {transform_indices = @transform_2, window_bounds = array<i64: 1, 32, 128>}, {transform_indices = @transform_3, window_bounds = array<i64: 1, 4, 8, 128>}]} {
    %c0_i32 = arith.constant 0 : i32
    %0 = arith.cmpi eq, %arg1, %c0_i32 : i32
    %1 = arith.extui %0 : i1 to i32
    %c0_i32_0 = arith.constant 0 : i32
    %2 = arith.cmpi ne, %1, %c0_i32_0 : i32
    scf.if %2 {
      %cst_25 = arith.constant 0.000000e+00 : f32
      %40 = vector.broadcast %cst_25 : f32 to vector<1x4x8x128xf32>
      %c0_26 = arith.constant 0 : index
      %c0_27 = arith.constant 0 : index
      %c0_28 = arith.constant 0 : index
      %c0_29 = arith.constant 0 : index
      %41 = vector.load %arg5[%c0_26, %c0_27, %c0_28, %c0_29] : memref<1x4x8x128xf32, #tpu.memory_space<vmem>>, vector<1x4x8x128xf32>
      tpu.vector_store %arg5[%c0_26, %c0_27, %c0_28, %c0_29], %40 {strides = array<i32>} : memref<1x4x8x128xf32, #tpu.memory_space<vmem>>, vector<1x4x8x128xf32>,
    } else {
    }
    %c0 = arith.constant 0 : index
    %c0_1 = arith.constant 0 : index
    %c0_2 = arith.constant 0 : index
    %c0_3 = arith.constant 0 : index
    %3 = vector.load %arg2[%c0, %c0_1, %c0_2, %c0_3] : memref<1x4x32x128xf32, #tpu.memory_space<vmem>>, vector<1x4x32x128xf32>
    %4 = vector.shape_cast %3 : vector<1x4x32x128xf32> to vector<4x32x128xf32>
    %c0_4 = arith.constant 0 : index
    %c0_5 = arith.constant 0 : index
    %c0_6 = arith.constant 0 : index
    %c0_7 = arith.constant 0 : index
    %5 = vector.load %arg3[%c0_4, %c0_5, %c0_6, %c0_7] : memref<1x4x32x128xf32, #tpu.memory_space<vmem>>, vector<1x4x32x128xf32>
    %6 = vector.shape_cast %5 : vector<1x4x32x128xf32> to vector<4x32x128xf32>
    %7 = arith.subf %4, %6 : vector<4x32x128xf32>
    %8 = math.absf %7 : vector<4x32x128xf32>
    %cst = arith.constant dense<0.000000e+00> : vector<32x128xf32>
    %9 = vector.multi_reduction <add>, %8, %cst [0] : vector<4x32x128xf32> to vector<32x128xf32>
    %c0_8 = arith.constant 0 : index
    %c0_9 = arith.constant 0 : index
    %c0_10 = arith.constant 0 : index
    %10 = vector.load %arg4[%c0_8, %c0_9, %c0_10] : memref<1x32x128xi8, #tpu.memory_space<vmem>>, vector<1x32x128xi8>
    %11 = vector.shape_cast %10 : vector<1x32x128xi8> to vector<32x128xi8>
    %12 = arith.sitofp %11 : vector<32x128xi8> to vector<32x128xf32>
    %cst_11 = arith.constant 1.000000e+00 : f32
    %13 = vector.broadcast %cst_11 : f32 to vector<32x128xf32>
    %14 = arith.cmpf oeq, %12, %13 : vector<32x128xf32>
    %15 = arith.extui %14 : vector<32x128xi1> to vector<32x128xi32>
    %16 = arith.sitofp %15 : vector<32x128xi32> to vector<32x128xf32>
    %cst_12 = arith.constant 0.000000e+00 : f32
    %17 = vector.broadcast %cst_12 : f32 to vector<32x128xf32>
    %18 = arith.cmpf oeq, %12, %17 : vector<32x128xf32>
    %19 = arith.extui %18 : vector<32x128xi1> to vector<32x128xi32>
    %20 = arith.sitofp %19 : vector<32x128xi32> to vector<32x128xf32>
    %21 = arith.mulf %9, %16 : vector<32x128xf32>
    %22 = vector.shape_cast %21 : vector<32x128xf32> to vector<4x8x128xf32>
    %cst_13 = arith.constant dense<0.000000e+00> : vector<8x128xf32>
    %23 = vector.multi_reduction <add>, %22, %cst_13 [0] : vector<4x8x128xf32> to vector<8x128xf32>
    %24 = arith.mulf %9, %20 : vector<32x128xf32>
    %25 = vector.shape_cast %24 : vector<32x128xf32> to vector<4x8x128xf32>
    %cst_14 = arith.constant dense<0.000000e+00> : vector<8x128xf32>
    %26 = vector.multi_reduction <add>, %25, %cst_14 [0] : vector<4x8x128xf32> to vector<8x128xf32>
    %27 = vector.shape_cast %16 : vector<32x128xf32> to vector<4x8x128xf32>
    %cst_15 = arith.constant dense<0.000000e+00> : vector<8x128xf32>
    %28 = vector.multi_reduction <add>, %27, %cst_15 [0] : vector<4x8x128xf32> to vector<8x128xf32>
    %29 = vector.shape_cast %20 : vector<32x128xf32> to vector<4x8x128xf32>
    %cst_16 = arith.constant dense<0.000000e+00> : vector<8x128xf32>
    %30 = vector.multi_reduction <add>, %29, %cst_16 [0] : vector<4x8x128xf32> to vector<8x128xf32>
    %31 = vector.shape_cast %23 : vector<8x128xf32> to vector<1x8x128xf32>
    %32 = vector.shape_cast %26 : vector<8x128xf32> to vector<1x8x128xf32>
    %33 = vector.shape_cast %28 : vector<8x128xf32> to vector<1x8x128xf32>
    %34 = vector.shape_cast %30 : vector<8x128xf32> to vector<1x8x128xf32>
    %35 = tpu.concatenate %31, %32, %33, %34 in 0 : vector<1x8x128xf32>, vector<1x8x128xf32>, vector<1x8x128xf32>, vector<1x8x128xf32> -> vector<4x8x128xf32>
    %36 = vector.shape_cast %35 : vector<4x8x128xf32> to vector<1x4x8x128xf32>
    %c0_17 = arith.constant 0 : index
    %c0_18 = arith.constant 0 : index
    %c0_19 = arith.constant 0 : index
    %c0_20 = arith.constant 0 : index
    %37 = vector.load %arg5[%c0_17, %c0_18, %c0_19, %c0_20] : memref<1x4x8x128xf32, #tpu.memory_space<vmem>>, vector<1x4x8x128xf32>
    %38 = arith.addf %37, %36 : vector<1x4x8x128xf32>
    %c0_21 = arith.constant 0 : index
    %c0_22 = arith.constant 0 : index
    %c0_23 = arith.constant 0 : index
    %c0_24 = arith.constant 0 : index
    %39 = vector.load %arg5[%c0_21, %c0_22, %c0_23, %c0_24] : memref<1x4x8x128xf32, #tpu.memory_space<vmem>>, vector<1x4x8x128xf32>
    tpu.vector_store %arg5[%c0_21, %c0_22, %c0_23, %c0_24], %38 {strides = array<i32>} : memref<1x4x8x128xf32, #tpu.memory_space<vmem>>, vector<1x4x8x128xf32>,
    return
  }
  func.func @transform_0(%arg0: i32, %arg1: i32) -> (i32, i32, i32, i32) {
    %c0_i32 = arith.constant 0 : i32
    %c0_i32_0 = arith.constant 0 : i32
    %c0_i32_1 = arith.constant 0 : i32
    return %arg0, %c0_i32, %arg1, %c0_i32_0 : i32, i32, i32, i32
  }
  func.func @transform_1(%arg0: i32, %arg1: i32) -> (i32, i32, i32, i32) {
    %c0_i32 = arith.constant 0 : i32
    %c0_i32_0 = arith.constant 0 : i32
    %c0_i32_1 = arith.constant 0 : i32
    return %arg0, %c0_i32, %arg1, %c0_i32_0 : i32, i32, i32, i32
  }
  func.func @transform_2(%arg0: i32, %arg1: i32) -> (i32, i32, i32) {
    %c0_i32 = arith.constant 0 : i32
    %c0_i32_0 = arith.constant 0 : i32
    return %arg0, %arg1, %c0_i32 : i32, i32, i32
  }
  func.func @transform_3(%arg0: i32, %arg1: i32) -> (i32, i32, i32, i32) {
    %c0_i32 = arith.constant 0 : i32
    %c0_i32_0 = arith.constant 0 : i32
    %c0_i32_1 = arith.constant 0 : i32
    %c0_i32_2 = arith.constant 0 : i32
    return %arg0, %c0_i32, %c0_i32_0, %c0_i32_1 : i32, i32, i32, i32
  }
}

</mosaic_0001>

<llo_original>
// kernel: tpu_custom_call.1
$region0: #{tpu_custom_call.1}
  #allocation0 [shape = 'u32[]', space=smem, size = 0x4, offset = 0x4, fixed_abs, tag = 'smem constant byte address 0x4 - core index']
  #allocation1 [shape = 'u32[144,128]{1,0:T(1,128)}', space=vmem, size = 0x12000, scoped, tag = 'internal scratch']
  %s0 = inlined_call_operand.hbm [shape: f32[2,4,32,128], index: 0, kind: input, shape index: {}]
  %s1 = inlined_call_operand.hbm [shape: f32[2,4,32,128], index: 1, kind: input, shape index: {}]
  %s2 = inlined_call_operand.hbm [shape: s8[2,32,128], index: 2, kind: input, shape index: {}]
  %s3 = inlined_call_operand.hbm [shape: f32[2,4,8,128], index: 3, kind: output, shape index: {}]
  %s4 = sld [smem:[#allocation0]]
  $region61: #{tpu_custom_call.1} parent=0
    _
  %s6 = ssub.s32 1, %s4
  %s7 = scalar_select 0, %s6, %s4
  $region1: #{tpu_custom_call.1} parent=0
    #allocation2 [shape = 'u8[131072]{0}', space=vmem, size = 0x20000, scoped, tag = 'input window, operand 0']
    #allocation3 [shape = 's32[2]{0}', space=sflag, size = 0x8, scoped, tag = 'scoped memory for tpu_custom_call.1']
    #allocation4 [shape = 's32[2]{0}', space=sflag, size = 0x8, scoped, tag = 'scoped memory for tpu_custom_call.1']
    #allocation5 [shape = 'u8[131072]{0}', space=vmem, size = 0x20000, scoped, tag = 'input window, operand 1']
    #allocation6 [shape = 's32[2]{0}', space=sflag, size = 0x8, scoped, tag = 'scoped memory for tpu_custom_call.1']
    #allocation7 [shape = 'u8[8192]{0}', space=vmem, size = 0x2000, scoped, tag = 'input window, operand 2']
    #allocation8 [shape = 'u8[32768]{0}', space=vmem, size = 0x8000, scoped, tag = 'output window, operand 0']
    %8 = vsyncpa [#allocation3], 0
    %s9 = scalar_lea.sflag [#allocation3], 1
    %10 = vsyncpa %s9, 0
    %11 = vsyncpa [#allocation6], 0
    %s12 = scalar_lea.sflag [#allocation6], 1
    %13 = vsyncpa %s12, 0
    %14 = vsyncpa [#allocation4], 0
    %s15 = scalar_lea.sflag [#allocation4], 1
    %16 = vsyncpa %s15, 0
    loop: start=0, step=1, limit=4
    $region2: #{tpu_custom_call.1} parent=1 // loop_pre_header
      _
    $region3: #{tpu_custom_call.1} parent=1 // loop_header
      %s18 = sphi 0, %s22
      %p19 = scmp.ge.s32.totalorder %s18, 4
      %s25 = sphi 0, %s37
      %s26 = sphi 0, %s33
      %s27 = sphi 0, %s25
      %s28 = sphi 0, %s26
      %s29 = sphi 0, %s27
      %s30 = sphi 0, %s28
      %s42 = sphi 0, %s44
      %s45 = sphi 0, %s42
      %s46 = sphi 0, %s45
      %s62 = sphi 0, %s46
      %s70 = sphi 0, %s72
      %s73 = sphi 0, %s70
      %s74 = sphi 0, %s73
      %s90 = sphi 0, %s74
      %s98 = sphi 0, %s100
      %s101 = sphi 0, %s98
      %s102 = sphi 0, %s101
      %s118 = sphi 0, %s102
      %s124 = sphi 0, %s126
      %s127 = sphi 0, %s124
      %s128 = sphi 0, %s127
      %s144 = sphi 0, %s128
    $region4: #{tpu_custom_call.1} parent=1 // loop_header_branch
      %21 = sbr.rel (%p19) target = $region8
    $region5: #{tpu_custom_call.1} parent=1 // loop_body
      %s23 = ssub.s32 %s18, 1
      %s24 = ssub.s32 %s18, 2
      %s31 = sadd.s32 1, %s26
      %p32 = scmp.ge.s32.totalorder %s31, 1
      %s33 = scalar_select %p32, 0, %s31
      %s34 = sadd.s32 1, %s25
      %s35 = scalar_select %p32, %s34, %s25
      %p36 = scmp.ge.s32.totalorder %s35, 2
      %s37 = scalar_select %p36, 0, %s35
      %s38 = ssub.s32 %s25, %s37
      %s39 = ssub.s32 %s26, %s33
      %s40 = sor.u32 %s38, %s39
      %p41 = scmp.eq.s32.totalorder %s40, 0
      %s43 = sadd.s32 %s42, 1
      %s44 = scalar_select %p41, %s42, %s43
      %p47 = pneg %p41
      %p48 = scmp.eq.s32.totalorder %s18, 1
      %p49 = por %p47, %p48
      %p50 = scmp.ne.s32.totalorder %s42, %s45
      %p51 = scmp.eq.s32.totalorder %s18, 0
      %p52 = por %p50, %p51
      %p53 = scmp.ne.s32.totalorder %s42, %s45
      %p54 = scmp.eq.s32.totalorder %s23, 1
      %p55 = por %p53, %p54
      %p56 = scmp.ne.s32.totalorder %s45, %s46
      %p57 = scmp.eq.s32.totalorder %s23, 0
      %p58 = por %p56, %p57
      %p59 = scmp.ne.s32.totalorder %s45, %s46
      %p60 = scmp.eq.s32.totalorder %s24, 1
      %p61 = por %p59, %p60
      %p63 = scmp.ne.s32.totalorder %s46, %s62
      %p64 = scmp.eq.s32.totalorder %s24, 0
      %p65 = por %p63, %p64
      %s66 = ssub.s32 %s25, %s37
      %s67 = ssub.s32 %s26, %s33
      %s68 = sor.u32 %s66, %s67
      %p69 = scmp.eq.s32.totalorder %s68, 0
      %s71 = sadd.s32 %s70, 1
      %s72 = scalar_select %p69, %s70, %s71
      %p75 = pneg %p69
      %p76 = scmp.eq.s32.totalorder %s18, 1
      %p77 = por %p75, %p76
      %p78 = scmp.ne.s32.totalorder %s70, %s73
      %p79 = scmp.eq.s32.totalorder %s18, 0
      %p80 = por %p78, %p79
      %p81 = scmp.ne.s32.totalorder %s70, %s73
      %p82 = scmp.eq.s32.totalorder %s23, 1
      %p83 = por %p81, %p82
      %p84 = scmp.ne.s32.totalorder %s73, %s74
      %p85 = scmp.eq.s32.totalorder %s23, 0
      %p86 = por %p84, %p85
      %p87 = scmp.ne.s32.totalorder %s73, %s74
      %p88 = scmp.eq.s32.totalorder %s24, 1
      %p89 = por %p87, %p88
      %p91 = scmp.ne.s32.totalorder %s74, %s90
      %p92 = scmp.eq.s32.totalorder %s24, 0
      %p93 = por %p91, %p92
      %s94 = ssub.s32 %s25, %s37
      %s95 = ssub.s32 %s26, %s33
      %s96 = sor.u32 %s94, %s95
      %p97 = scmp.eq.s32.totalorder %s96, 0
      %s99 = sadd.s32 %s98, 1
      %s100 = scalar_select %p97, %s98, %s99
      %p103 = pneg %p97
      %p104 = scmp.eq.s32.totalorder %s18, 1
      %p105 = por %p103, %p104
      %p106 = scmp.ne.s32.totalorder %s98, %s101
      %p107 = scmp.eq.s32.totalorder %s18, 0
      %p108 = por %p106, %p107
      %p109 = scmp.ne.s32.totalorder %s98, %s101
      %p110 = scmp.eq.s32.totalorder %s23, 1
      %p111 = por %p109, %p110
      %p112 = scmp.ne.s32.totalorder %s101, %s102
      %p113 = scmp.eq.s32.totalorder %s23, 0
      %p114 = por %p112, %p113
      %p115 = scmp.ne.s32.totalorder %s101, %s102
      %p116 = scmp.eq.s32.totalorder %s24, 1
      %p117 = por %p115, %p116
      %p119 = scmp.ne.s32.totalorder %s102, %s118
      %p120 = scmp.eq.s32.totalorder %s24, 0
      %p121 = por %p119, %p120
      %s122 = ssub.s32 %s25, %s37
      %p123 = scmp.eq.s32.totalorder %s122, 0
      %s125 = sadd.s32 %s124, 1
      %s126 = scalar_select %p123, %s124, %s125
      %p129 = pneg %p123
      %p130 = scmp.eq.s32.totalorder %s18, 1
      %p131 = por %p129, %p130
      %p132 = scmp.ne.s32.totalorder %s124, %s127
      %p133 = scmp.eq.s32.totalorder %s18, 0
      %p134 = por %p132, %p133
      %p135 = scmp.ne.s32.totalorder %s124, %s127
      %p136 = scmp.eq.s32.totalorder %s23, 1
      %p137 = por %p135, %p136
      %p138 = scmp.ne.s32.totalorder %s127, %s128
      %p139 = scmp.eq.s32.totalorder %s23, 0
      %p140 = por %p138, %p139
      %p141 = scmp.ne.s32.totalorder %s127, %s128
      %p142 = scmp.eq.s32.totalorder %s24, 1
      %p143 = por %p141, %p142
      %p145 = scmp.ne.s32.totalorder %s128, %s144
      %p146 = scmp.eq.s32.totalorder %s24, 0
      %p147 = por %p145, %p146
      %p148 = scmp.le.s32.totalorder 1, %s18
      %p149 = scmp.lt.s32.totalorder %s18, 3
      %p150 = pnand %p148, %p149
      %p151 = pneg %p150
      // Predicated region
      $region9: #{tpu_custom_call.1} parent=5 // pred_check
        _
      $region10: #{tpu_custom_call.1} parent=5 // pred_check_branch
        %153 = sbr.rel (%p150) target = $region12
      $region11: #{tpu_custom_call.1} parent=5 // pred_region
        %s154 = ssub.s32 %s18, 1
      $region12: #{tpu_custom_call.1} parent=5 // pred_fallthru
        _
      %p155 = scmp.lt.s32.totalorder %s18, 2
      // Predicated region
      $region13: #{tpu_custom_call.1} parent=5 // pred_check
        %p156 = pneg %p155
      $region14: #{tpu_custom_call.1} parent=5 // pred_check_branch
        %158 = sbr.rel (%p156) target = $region16
      $region15: #{tpu_custom_call.1} parent=5 // pred_region
        // Predicated region
        $region17: #{tpu_custom_call.1} parent=15 // pred_check
          %p159 = pneg %p52
        $region18: #{tpu_custom_call.1} parent=15 // pred_check_branch
          %161 = sbr.rel (%p159) target = $region20
        $region19: #{tpu_custom_call.1} parent=15 // pred_region
          %s162 = sand.u32 %s42, 1
          %s163 = scalar_lea.sflag [#allocation3], %s162
          %s164 = sand.u32 %s42, 1
          %s165 = smul.addr %s164, 128
          %s166 = scalar_lea.vmem [#allocation2], %s165
          %s167 = smul.u32 4, %s26
          %s169 = ssub.s32 2048, 2048
          %170 = vsyncadd %s163, %s169
          %s171 = smul.addr %s25, 16
          %s172 = sadd.s32 %s167, %s171
          %s173 = smul.addr %s172, 128
          %s174 = scalar_lea.hbm %s0, %s173
          %s175 = sshll.u32 %s166, 4
          %s176 = int_to_ptr.vmem [resolvable:$true] %s175
          %181 = dma.hbm_to_vmem [thread:$0]  %s174, 2048, %s176, %s163, 128, 128, 8
        $region20: #{tpu_custom_call.1} parent=15 // pred_fallthru
          _
        // Predicated region
        $region21: #{tpu_custom_call.1} parent=15 // pred_check
          %p182 = pneg %p80
        $region22: #{tpu_custom_call.1} parent=15 // pred_check_branch
          %184 = sbr.rel (%p182) target = $region24
        $region23: #{tpu_custom_call.1} parent=15 // pred_region
          %s185 = sand.u32 %s18, 1
          %s186 = scalar_lea.sflag [#allocation6], %s185
          %s187 = sand.u32 %s70, 1
          %s188 = smul.addr %s187, 128
          %s189 = scalar_lea.vmem [#allocation5], %s188
          %s190 = smul.u32 4, %s26
          %s192 = ssub.s32 2048, 2048
          %193 = vsyncadd %s186, %s192
          %s194 = smul.addr %s25, 16
          %s195 = sadd.s32 %s190, %s194
          %s196 = smul.addr %s195, 128
          %s197 = scalar_lea.hbm %s1, %s196
          %s198 = sshll.u32 %s189, 4
          %s199 = int_to_ptr.vmem [resolvable:$true] %s198
          %204 = dma.hbm_to_vmem [thread:$0]  %s197, 2048, %s199, %s186, 128, 128, 8
        $region24: #{tpu_custom_call.1} parent=15 // pred_fallthru
          _
        // Predicated region
        $region25: #{tpu_custom_call.1} parent=15 // pred_check
          %p205 = pneg %p108
        $region26: #{tpu_custom_call.1} parent=15 // pred_check_branch
          %207 = sbr.rel (%p205) target = $region28
        $region27: #{tpu_custom_call.1} parent=15 // pred_region
          %s208 = sand.u32 %s18, 1
          %s209 = scalar_lea.sflag [#allocation6], %s208
          %s210 = sand.u32 %s98, 1
          %s211 = smul.addr %s210, 8
          %s212 = scalar_lea.vmem [#allocation7], %s211
          %s214 = ssub.s32 128, 128
          %215 = vsyncadd %s209, %s214
          %s216 = sadd.s32 %s26, %s25
          %s217 = smul.addr %s216, 128
          %s218 = scalar_lea.hbm %s2, %s217
          %s220 = sshll.u32 %s212, 4
          %s221 = int_to_ptr.vmem [resolvable:$true] %s220
          %223 = dma.hbm_to_vmem [thread:$0]  %s218, 128, %s221, %s209
        $region28: #{tpu_custom_call.1} parent=15 // pred_fallthru
          _
      $region16: #{tpu_custom_call.1} parent=5 // pred_fallthru
        _
      %p224 = scmp.le.s32.totalorder 1, %s18
      %p225 = scmp.lt.s32.totalorder %s18, 3
      %p226 = pnand %p224, %p225
      %p227 = pneg %p226
      // Predicated region
      $region29: #{tpu_custom_call.1} parent=5 // pred_check
        _
      $region30: #{tpu_custom_call.1} parent=5 // pred_check_branch
        %229 = sbr.rel (%p226) target = $region32
      $region31: #{tpu_custom_call.1} parent=5 // pred_region
        %s230 = ssub.s32 %s18, 1
        %s231 = sand.u32 %s45, 1
        %s232 = scalar_lea.sflag [#allocation3], %s231
        %s233 = sand.u32 %s45, 1
        %s234 = smul.addr %s233, 128
        %s235 = scalar_lea.vmem [#allocation2], %s234
        // Predicated region
        $region33: #{tpu_custom_call.1} parent=31 // pred_check
          %p236 = pneg %p58
        $region34: #{tpu_custom_call.1} parent=31 // pred_check_branch
          %238 = sbr.rel (%p236) target = $region36
        $region35: #{tpu_custom_call.1} parent=31 // pred_region
          %239 = dma.done %s232, 2048
        $region36: #{tpu_custom_call.1} parent=31 // pred_fallthru
          _
        %s240 = sand.u32 %s23, 1
        %s241 = scalar_lea.sflag [#allocation6], %s240
        %s242 = sand.u32 %s73, 1
        %s243 = smul.addr %s242, 128
        %s244 = scalar_lea.vmem [#allocation5], %s243
        // Predicated region
        $region37: #{tpu_custom_call.1} parent=31 // pred_check
          %p245 = pneg %p86
        $region38: #{tpu_custom_call.1} parent=31 // pred_check_branch
          %247 = sbr.rel (%p245) target = $region40
        $region39: #{tpu_custom_call.1} parent=31 // pred_region
          %248 = dma.done %s241, 2048
        $region40: #{tpu_custom_call.1} parent=31 // pred_fallthru
          _
        %s249 = sand.u32 %s23, 1
        %s250 = scalar_lea.sflag [#allocation6], %s249
        %s251 = sand.u32 %s101, 1
        %s252 = smul.addr %s251, 8
        %s253 = scalar_lea.vmem [#allocation7], %s252
        // Predicated region
        $region41: #{tpu_custom_call.1} parent=31 // pred_check
          %p254 = pneg %p114
        $region42: #{tpu_custom_call.1} parent=31 // pred_check_branch
          %256 = sbr.rel (%p254) target = $region44
        $region43: #{tpu_custom_call.1} parent=31 // pred_region
          %257 = dma.done %s250, 128
        $region44: #{tpu_custom_call.1} parent=31 // pred_fallthru
          _
        %s258 = sand.u32 %s45, 1
        %s259 = scalar_lea.sflag [#allocation3], %s258
        %s260 = sand.u32 %s45, 1
        %s261 = smul.addr %s260, 128
        %s262 = scalar_lea.vmem [#allocation2], %s261
        %p263 = pneg %p58
        %p264 = pneg %p55
        %s265 = sand.u32 %s23, 1
        %s266 = scalar_lea.sflag [#allocation6], %s265
        %s267 = sand.u32 %s73, 1
        %s268 = smul.addr %s267, 128
        %s269 = scalar_lea.vmem [#allocation5], %s268
        %p270 = pneg %p86
        %p271 = pneg %p83
        %s272 = sand.u32 %s23, 1
        %s273 = scalar_lea.sflag [#allocation6], %s272
        %s274 = sand.u32 %s101, 1
        %s275 = smul.addr %s274, 8
        %s276 = scalar_lea.vmem [#allocation7], %s275
        %p277 = pneg %p114
        %p278 = pneg %p111
        %p279 = pneg %p140
        %p280 = pneg %p137
        %s281 = sand.u32 %s127, 1
        %s282 = scalar_lea.sflag [#allocation4], %s281
        %s283 = sand.u32 %s127, 1
        %s284 = smul.addr %s283, 32
        %s285 = scalar_lea.vmem [#allocation8], %s284
        %s286 = smul.u32 4, %s28
        %s287 = smul.u32 4, %s28
        %p288 = scmp.eq.s32.totalorder %s28, 0
        // Predicated region
        $region45: #{tpu_custom_call.1} parent=31 // pred_check
          %p289 = pneg %p288
        $region46: #{tpu_custom_call.1} parent=31 // pred_check_branch
          %291 = sbr.rel (%p289) target = $region48
        $region47: #{tpu_custom_call.1} parent=31 // pred_region
          %292 = vst [vmem:[%s285] sm:$0xff] 0.0
          %293 = vst [vmem:[%s285 + $0x8] sm:$0xff] 0.0
          %294 = vst [vmem:[%s285 + $0x10] sm:$0xff] 0.0
          %295 = vst [vmem:[%s285 + $0x18] sm:$0xff] 0.0
        $region48: #{tpu_custom_call.1} parent=31 // pred_fallthru
          _
        %v296 = vld [vmem:[%s235] sm:$0xff]
        %v297 = vld [vmem:[%s235 + $0x8] sm:$0xff]
        %v298 = vld [vmem:[%s235 + $0x10] sm:$0xff]
        %v299 = vld [vmem:[%s235 + $0x18] sm:$0xff]
        %v300 = vld [vmem:[%s235 + $0x20] sm:$0xff]
        %v301 = vld [vmem:[%s235 + $0x28] sm:$0xff]
        %v302 = vld [vmem:[%s235 + $0x30] sm:$0xff]
        %v303 = vld [vmem:[%s235 + $0x38] sm:$0xff]
        %v304 = vld [vmem:[%s235 + $0x40] sm:$0xff]
        %v305 = vld [vmem:[%s235 + $0x48] sm:$0xff]
        %v306 = vld [vmem:[%s235 + $0x50] sm:$0xff]
        %v307 = vld [vmem:[%s235 + $0x58] sm:$0xff]
        %v308 = vld [vmem:[%s235 + $0x60] sm:$0xff]
        %v309 = vld [vmem:[%s235 + $0x68] sm:$0xff]
        %v310 = vld [vmem:[%s235 + $0x70] sm:$0xff]
        %v311 = vld [vmem:[%s235 + $0x78] sm:$0xff]
        %v312 = vld [vmem:[%s244] sm:$0xff]
        %v313 = vld [vmem:[%s244 + $0x8] sm:$0xff]
        %v314 = vld [vmem:[%s244 + $0x10] sm:$0xff]
        %v315 = vld [vmem:[%s244 + $0x18] sm:$0xff]
        %v316 = vld [vmem:[%s244 + $0x20] sm:$0xff]
        %v317 = vld [vmem:[%s244 + $0x28] sm:$0xff]
        %v318 = vld [vmem:[%s244 + $0x30] sm:$0xff]
        %v319 = vld [vmem:[%s244 + $0x38] sm:$0xff]
        %v320 = vld [vmem:[%s244 + $0x40] sm:$0xff]
        %v321 = vld [vmem:[%s244 + $0x48] sm:$0xff]
        %v322 = vld [vmem:[%s244 + $0x50] sm:$0xff]
        %v323 = vld [vmem:[%s244 + $0x58] sm:$0xff]
        %v324 = vld [vmem:[%s244 + $0x60] sm:$0xff]
        %v325 = vld [vmem:[%s244 + $0x68] sm:$0xff]
        %v326 = vld [vmem:[%s244 + $0x70] sm:$0xff]
        %v327 = vld [vmem:[%s244 + $0x78] sm:$0xff]
        %v328 = vsub.f32 %v296, %v312
        %v329 = vsub.f32 %v297, %v313
        %v330 = vsub.f32 %v298, %v314
        %v331 = vsub.f32 %v299, %v315
        %v332 = vsub.f32 %v300, %v316
        %v333 = vsub.f32 %v301, %v317
        %v334 = vsub.f32 %v302, %v318
        %v335 = vsub.f32 %v303, %v319
        %v336 = vsub.f32 %v304, %v320
        %v337 = vsub.f32 %v305, %v321
        %v338 = vsub.f32 %v306, %v322
        %v339 = vsub.f32 %v307, %v323
        %v340 = vsub.f32 %v308, %v324
        %v341 = vsub.f32 %v309, %v325
        %v342 = vsub.f32 %v310, %v326
        %v343 = vsub.f32 %v311, %v327
        %v344 = vand.u32 2147483647, %v328
        %v345 = vand.u32 2147483647, %v329
        %v346 = vand.u32 2147483647, %v330
        %v347 = vand.u32 2147483647, %v331
        %v348 = vand.u32 2147483647, %v332
        %v349 = vand.u32 2147483647, %v333
        %v350 = vand.u32 2147483647, %v334
        %v351 = vand.u32 2147483647, %v335
        %v352 = vand.u32 2147483647, %v336
        %v353 = vand.u32 2147483647, %v337
        %v354 = vand.u32 2147483647, %v338
        %v355 = vand.u32 2147483647, %v339
        %v356 = vand.u32 2147483647, %v340
        %v357 = vand.u32 2147483647, %v341
        %v358 = vand.u32 2147483647, %v342
        %v359 = vand.u32 2147483647, %v343
        %v360 = vadd.f32 %v344, %v348
        %v361 = vadd.f32 %v360, %v352
        %v362 = vadd.f32 %v361, %v356
        %v363 = vadd.f32 %v345, %v349
        %v364 = vadd.f32 %v363, %v353
        %v365 = vadd.f32 %v364, %v357
        %v366 = vadd.f32 %v346, %v350
        %v367 = vadd.f32 %v366, %v354
        %v368 = vadd.f32 %v367, %v358
        %v369 = vadd.f32 %v347, %v351
        %v370 = vadd.f32 %v369, %v355
        %v371 = vadd.f32 %v370, %v359
        %v372 = vld [vmem:[%s253] sm:$0xff]
        %v373 = vunpack.c.0.s8 %v372
        %v374 = vunpack.c.1.s8 %v372
        %v375 = vunpack.c.2.s8 %v372
        %v376 = vunpack.c.3.s8 %v372
        %v377 = vcvt.s32.f32 %v373
        %v378 = vcvt.s32.f32 %v374
        %v379 = vcvt.s32.f32 %v375
        %v380 = vcvt.s32.f32 %v376
        %vm381 = vcmp.eq.f32.partialorder %v377, 1.0
        %vm382 = vcmp.eq.f32.partialorder %v378, 1.0
        %vm383 = vcmp.eq.f32.partialorder %v379, 1.0
        %vm384 = vcmp.eq.f32.partialorder %v380, 1.0
        %v385 = vsel %vm381, 1, 0
        %v386 = vsel %vm382, 1, 0
        %v387 = vsel %vm383, 1, 0
        %v388 = vsel %vm384, 1, 0
        %v389 = vcvt.s32.f32 %v385
        %v390 = vcvt.s32.f32 %v386
        %v391 = vcvt.s32.f32 %v387
        %v392 = vcvt.s32.f32 %v388
        %vm393 = vcmp.eq.f32.partialorder %v377, 0.0
        %vm394 = vcmp.eq.f32.partialorder %v378, 0.0
        %vm395 = vcmp.eq.f32.partialorder %v379, 0.0
        %vm396 = vcmp.eq.f32.partialorder %v380, 0.0
        %v397 = vsel %vm393, 1, 0
        %v398 = vsel %vm394, 1, 0
        %v399 = vsel %vm395, 1, 0
        %v400 = vsel %vm396, 1, 0
        %v401 = vcvt.s32.f32 %v397
        %v402 = vcvt.s32.f32 %v398
        %v403 = vcvt.s32.f32 %v399
        %v404 = vcvt.s32.f32 %v400
        %v405 = vmul.f32 %v362, %v389
        %v406 = vmul.f32 %v365, %v390
        %v407 = vmul.f32 %v368, %v391
        %v408 = vmul.f32 %v371, %v392
        %v409 = vadd.f32 %v405, %v406
        %v410 = vadd.f32 %v409, %v407
        %v411 = vadd.f32 %v410, %v408
        %v412 = vmul.f32 %v362, %v401
        %v413 = vmul.f32 %v365, %v402
        %v414 = vmul.f32 %v368, %v403
        %v415 = vmul.f32 %v371, %v404
        %v416 = vadd.f32 %v412, %v413
        %v417 = vadd.f32 %v416, %v414
        %v418 = vadd.f32 %v417, %v415
        %v419 = vadd.f32 %v389, %v390
        %v420 = vadd.f32 %v419, %v391
        %v421 = vadd.f32 %v420, %v392
        %v422 = vadd.f32 %v401, %v402
        %v423 = vadd.f32 %v422, %v403
        %v424 = vadd.f32 %v423, %v404
        %v425 = vld [vmem:[%s285] sm:$0xff]
        %v426 = vld [vmem:[%s285 + $0x8] sm:$0xff]
        %v427 = vld [vmem:[%s285 + $0x10] sm:$0xff]
        %v428 = vld [vmem:[%s285 + $0x18] sm:$0xff]
        %v429 = vadd.f32 %v425, %v411
        %v430 = vadd.f32 %v426, %v418
        %v431 = vadd.f32 %v427, %v421
        %v432 = vadd.f32 %v428, %v424
        %433 = vst [vmem:[%s285] sm:$0xff] %v429
        %434 = vst [vmem:[%s285 + $0x8] sm:$0xff] %v430
        %435 = vst [vmem:[%s285 + $0x10] sm:$0xff] %v431
        %436 = vst [vmem:[%s285 + $0x18] sm:$0xff] %v432
        %s437 = sand.u32 %s127, 1
        %s438 = scalar_lea.sflag [#allocation4], %s437
        %s439 = sand.u32 %s127, 1
        %s440 = smul.addr %s439, 32
        %s441 = scalar_lea.vmem [#allocation8], %s440
        // Predicated region
        $region49: #{tpu_custom_call.1} parent=31 // pred_check
          %p442 = pneg %p137
        $region50: #{tpu_custom_call.1} parent=31 // pred_check_branch
          %444 = sbr.rel (%p442) target = $region52
        $region51: #{tpu_custom_call.1} parent=31 // pred_region
          %s446 = ssub.s32 512, 512
          %447 = vsyncadd %s438, %s446
          %s448 = smul.addr %s27, 4
          %s449 = smul.addr %s448, 128
          %s450 = scalar_lea.hbm %s3, %s449
          %s451 = sshll.u32 %s441, 4
          %s452 = int_to_ptr.vmem [resolvable:$true] %s451
          %457 = dma.vmem_to_hbm [thread:$0]  %s452, 512, %s450, %s438, 128, 128, 8
        $region52: #{tpu_custom_call.1} parent=31 // pred_fallthru
          _
      $region32: #{tpu_custom_call.1} parent=5 // pred_fallthru
        _
      %p458 = scmp.le.s32.totalorder 2, %s18
      // Predicated region
      $region53: #{tpu_custom_call.1} parent=5 // pred_check
        %p459 = pneg %p458
      $region54: #{tpu_custom_call.1} parent=5 // pred_check_branch
        %461 = sbr.rel (%p459) target = $region56
      $region55: #{tpu_custom_call.1} parent=5 // pred_region
        %s462 = ssub.s32 %s18, 2
        // Predicated region
        $region57: #{tpu_custom_call.1} parent=55 // pred_check
          %p463 = pneg %p143
        $region58: #{tpu_custom_call.1} parent=55 // pred_check_branch
          %465 = sbr.rel (%p463) target = $region60
        $region59: #{tpu_custom_call.1} parent=55 // pred_region
          %s466 = sand.u32 %s128, 1
          %s467 = scalar_lea.sflag [#allocation4], %s466
          %s468 = sand.u32 %s128, 1
          %s469 = smul.addr %s468, 32
          %s470 = scalar_lea.vmem [#allocation8], %s469
          %471 = dma.done %s467, 512
        $region60: #{tpu_custom_call.1} parent=55 // pred_fallthru
          _
      $region56: #{tpu_custom_call.1} parent=5 // pred_fallthru
        _
    $region6: #{tpu_custom_call.1} parent=1 // loop_footer
      %s22 = sadd.s32 1, %s18
    $region7: #{tpu_custom_call.1} parent=1 // loop_footer_branch
      %17 = sbr.rel target = $region3
    $region8: #{tpu_custom_call.1} parent=1 // loop_exit
      _
    %472 = vsyncpa [#allocation3], 1
    %s473 = scalar_lea.sflag [#allocation3], 1
    %474 = vsyncpa %s473, 1
    %475 = vsyncpa [#allocation6], 1
    %s476 = scalar_lea.sflag [#allocation6], 1
    %477 = vsyncpa %s476, 1
    %478 = vsyncpa [#allocation4], 1
    %s479 = scalar_lea.sflag [#allocation4], 1
    %480 = vsyncpa %s479, 1

</llo_original>
